<compile_context>
chip_gen: v7x
topology: tpu7x:2x2x1
jax: 0.10.0
libtpu: 0.0.40
codegen_flags: <defaults>
</compile_context>

<pallas_src>
import jax
import jax.numpy as jnp
from jax.experimental import pallas as pl
from jax.experimental.pallas import tpu as pltpu


def _identity_kernel(x_ref, o_ref):
    # Pure pass-through: copy the current block from input to output.
    o_ref[...] = x_ref[...]


def _copy_slab(slab, block_rows, lane):
    """Tiled identity copy of a (rows, lane) lane-dense slab."""
    rows = slab.shape[0]
    grid = (rows // block_rows,)
    return pl.pallas_call(
        _identity_kernel,
        out_shape=jax.ShapeDtypeStruct((rows, lane), slab.dtype),
        grid_spec=pltpu.PrefetchScalarGridSpec(
            num_scalar_prefetch=0,
            grid=grid,
            in_specs=[pl.BlockSpec((block_rows, lane), lambda i: (i, 0))],
            out_specs=pl.BlockSpec((block_rows, lane), lambda i: (i, 0)),
        ),
        # Identity copy: let the output reuse the input slab's HBM buffer.
        input_output_aliases={0: 0},
        compiler_params=pltpu.CompilerParams(
            dimension_semantics=("parallel",)
        ),
    )(slab)


def _choose_layout(n_elem, itemsize):
    """Pick (lane_width, rows, block_rows) for a lane-dense slab.

    Blocks are capped at ~1 MiB each so the pipelined footprint
    (2 input + 2 output buffers) stays ~4 MiB — safe on v5e/v6e/v7x
    default scoped-VMEM limits.
    """
    # Widest lane-dense width that exactly tiles the element count.
    lane = None
    for cand in (1024, 512, 256, 128):
        if n_elem % cand == 0:
            lane = cand
            break
    if lane is None:
        return None  # caller falls back to a padded path

    rows = n_elem // lane

    # Dtype-aware sublane packing: 8 rows (f32), 16 (bf16/f16), 32 (int8/fp8).
    sub_pack = 8 * max(1, 4 // itemsize)

    target_block_bytes = 1 << 20  # 1 MiB per block
    max_rows = (target_block_bytes // (lane * itemsize)) // sub_pack * sub_pack
    max_rows = max(sub_pack, max_rows)

    if rows % sub_pack != 0:
        # Single block equal to full array dims (no (8,128) divisibility
        # requirement when block == full dims). Only taken for small inputs.
        block_rows = rows
    else:
        block_rows = min(rows, max_rows)
        # Ensure the block tiles the slab exactly (no ragged last block).
        while rows % block_rows != 0:
            block_rows -= sub_pack
    return lane, rows, block_rows


def base_network_forward(x):
    """Pallas 'forward' for BaseNetwork: identity pass-through."""
    orig_shape = x.shape
    orig_dtype = x.dtype
    n_elem = x.size
    itemsize = jnp.dtype(orig_dtype).itemsize

    layout = _choose_layout(n_elem, itemsize)

    if layout is not None:
        lane, rows, block_rows = layout
        slab = x.reshape(rows, lane)          # free bitcast, no HBM copy
        out = _copy_slab(slab, block_rows, lane)
        return out.reshape(orig_shape)

    # Rare fallback: element count not a multiple of 128 lanes -> pad.
    lane = 128
    sub_pack = 8 * max(1, 4 // itemsize)
    flat = x.reshape(-1)
    n_pad = (-n_elem) % (lane * sub_pack)
    if n_pad:
        flat = jnp.concatenate([flat, jnp.zeros((n_pad,), dtype=orig_dtype)])
    rows = flat.size // lane
    block_rows = rows  # single block == full dims
    out = _copy_slab(flat.reshape(rows, lane), block_rows, lane)
    return out.reshape(-1)[:n_elem].reshape(orig_shape)


if __name__ == "__main__":
    key = jax.random.PRNGKey(0)
    # Small NCHW batch consistent with an image-network input.
    x = jax.random.normal(key, (2, 4, 16, 16), dtype=jnp.float32)

    y = base_network_forward(x)
    y = jax.block_until_ready(y)

    # Sanity check: identity semantics (forward is a no-op stub).
    assert y.shape == x.shape and y.dtype == x.dtype
    assert bool(jnp.allclose(y, x))

    print("KERNEL_OK")
</pallas_src>

<mosaic_0001>
module attributes {stable_mosaic.version = 11 : i64} {
  func.func @_identity_kernel(%arg0: i32, %arg1: memref<2x1024xf32, #tpu.memory_space<vmem>>, %arg2: memref<2x1024xf32, #tpu.memory_space<vmem>>) attributes {dimension_semantics = [#tpu.dimension_semantics<parallel>], iteration_bounds = array<i64: 1>, scalar_prefetch = 0 : i64, scratch_operands = 0 : i64, tpu.core_type = #tpu.core_type<tc>, window_params = [{transform_indices = @transform_0, window_bounds = array<i64: 2, 1024>}, {transform_indices = @transform_1, window_bounds = array<i64: 2, 1024>}]} {
    %c0 = arith.constant 0 : index
    %c0_0 = arith.constant 0 : index
    %0 = vector.load %arg1[%c0, %c0_0] : memref<2x1024xf32, #tpu.memory_space<vmem>>, vector<2x1024xf32>
    %c0_1 = arith.constant 0 : index
    %c0_2 = arith.constant 0 : index
    %1 = vector.load %arg2[%c0_1, %c0_2] : memref<2x1024xf32, #tpu.memory_space<vmem>>, vector<2x1024xf32>
    tpu.vector_store %arg2[%c0_1, %c0_2], %0 {strides = array<i32>} : memref<2x1024xf32, #tpu.memory_space<vmem>>, vector<2x1024xf32>,
    return
  }
  func.func @transform_0(%arg0: i32) -> (i32, i32) {
    %c0_i32 = arith.constant 0 : i32
    %c0_i32_0 = arith.constant 0 : i32
    return %arg0, %c0_i32 : i32, i32
  }
  func.func @transform_1(%arg0: i32) -> (i32, i32) {
    %c0_i32 = arith.constant 0 : i32
    %c0_i32_0 = arith.constant 0 : i32
    return %arg0, %c0_i32 : i32, i32
  }
}

</mosaic_0001>

<llo_original>
// kernel: tpu_custom_call.1
$region0: #{tpu_custom_call.1}
  #allocation0 [shape = 'u32[]', space=smem, size = 0x4, offset = 0x4, fixed_abs, tag = 'smem constant byte address 0x4 - core index']
  #allocation1 [shape = 'u32[144,128]{1,0:T(1,128)}', space=vmem, size = 0x12000, scoped, tag = 'internal scratch']
  %s0 = inlined_call_operand.hbm [shape: f32[2,1024], index: 0, kind: input, shape index: {}, may-alias: {0,1}]
  %s1 = inlined_call_operand.hbm [shape: f32[2,1024], index: 1, kind: output, shape index: {}, may-alias: {0,1}]
  %s2 = sld [smem:[#allocation0]]
  $region18: #{tpu_custom_call.1} parent=0
    _
  %s4 = ssub.s32 1, %s2
  %s5 = scalar_select 0, %s4, %s2
  $region1: #{tpu_custom_call.1} parent=0
    #allocation2 [shape = 'u8[8192]{0}', space=vmem, size = 0x2000, scoped, tag = 'input window, operand 0, single buffered']
    #allocation3 [shape = 's32[1]{0}', space=sflag, size = 0x4, scoped, tag = 'scoped memory for tpu_custom_call.1']
    #allocation4 [shape = 's32[1]{0}', space=sflag, size = 0x4, scoped, tag = 'scoped memory for tpu_custom_call.1']
    #allocation5 [shape = 'u8[8192]{0}', space=vmem, size = 0x2000, scoped, tag = 'output window, operand 0, single buffered']
    %6 = vsyncpa [#allocation3], 0
    %7 = vsyncpa [#allocation4], 0
    // Predicated region
    $region2: #{tpu_custom_call.1} parent=1 // pred_check
      _
    $region3: #{tpu_custom_call.1} parent=1 // pred_check_branch
      %9 = sbr.rel (0) target = $region5
    $region4: #{tpu_custom_call.1} parent=1 // pred_region
      %s11 = ssub.s32 256, 256
      %12 = vsyncadd [#allocation3], %s11
      %s14 = sshll.u32 [#allocation2], 4
      %s15 = int_to_ptr.vmem [resolvable:$true] %s14
      %17 = dma.hbm_to_vmem [thread:$0]  %s0, 256, %s15, [#allocation3]
    $region5: #{tpu_custom_call.1} parent=1 // pred_fallthru
      _
    // Predicated region
    $region6: #{tpu_custom_call.1} parent=1 // pred_check
      _
    $region7: #{tpu_custom_call.1} parent=1 // pred_check_branch
      %19 = sbr.rel (0) target = $region9
    $region8: #{tpu_custom_call.1} parent=1 // pred_region
      %20 = dma.done [#allocation3], 256
    $region9: #{tpu_custom_call.1} parent=1 // pred_fallthru
      _
    %v21 = vld [vmem:[#allocation2] sm:$0xff]
    %v22 = vld [vmem:[#allocation2 + $0x8] sm:$0xff]
    %23 = vst [vmem:[#allocation5] sm:$0xff] %v21
    %24 = vst [vmem:[#allocation5 + $0x8] sm:$0xff] %v22
    // Predicated region
    $region10: #{tpu_custom_call.1} parent=1 // pred_check
      _
    $region11: #{tpu_custom_call.1} parent=1 // pred_check_branch
      %26 = sbr.rel (0) target = $region13
    $region12: #{tpu_custom_call.1} parent=1 // pred_region
      %s28 = ssub.s32 256, 256
      %29 = vsyncadd [#allocation4], %s28
      %s31 = sshll.u32 [#allocation5], 4
      %s32 = int_to_ptr.vmem [resolvable:$true] %s31
      %34 = dma.vmem_to_hbm [thread:$0]  %s32, 256, %s1, [#allocation4]
    $region13: #{tpu_custom_call.1} parent=1 // pred_fallthru
      _
    // Predicated region
    $region14: #{tpu_custom_call.1} parent=1 // pred_check
      _
    $region15: #{tpu_custom_call.1} parent=1 // pred_check_branch
      %36 = sbr.rel (0) target = $region17
    $region16: #{tpu_custom_call.1} parent=1 // pred_region
      %37 = dma.done [#allocation4], 256
    $region17: #{tpu_custom_call.1} parent=1 // pred_fallthru
      _
    %38 = vsyncpa [#allocation3], 1
    %39 = vsyncpa [#allocation4], 1

</llo_original>
